<compile_context>
chip_gen: v7x
topology: tpu7x:2x2x1
jax: 0.10.0
libtpu: 0.0.40
codegen_flags: <defaults>
</compile_context>

<pallas_src>
import jax
import jax.numpy as jnp
from jax.experimental import pallas as pl
from jax.experimental.pallas import tpu as pltpu

D_IN = 28 * 28       # 784
D_H1 = 128
D_H2 = 64
D_OUT = 10
D_OUT_PAD = 128      # lane-dense padded output width


def _round_up(x, m):
    return (x + m - 1) // m * m


def _mlp_kernel(x_ref, w1_ref, b1_ref, w2_ref, b2_ref, w3_ref, b3_ref, o_ref):
    # x tile (TB, 784) bf16; weights bf16 (VMEM-resident across grid steps);
    # biases f32; every matmul accumulates in f32 on the MXU.
    h1 = jnp.dot(x_ref[...], w1_ref[...], preferred_element_type=jnp.float32)
    h1 = jnp.maximum(h1 + b1_ref[...], 0.0)

    h2 = jnp.dot(h1.astype(jnp.bfloat16), w2_ref[...],
                 preferred_element_type=jnp.float32)
    h2 = jnp.maximum(h2 + b2_ref[...], 0.0)

    h3 = jnp.dot(h2.astype(jnp.bfloat16), w3_ref[...],
                 preferred_element_type=jnp.float32)
    o_ref[...] = jnp.maximum(h3 + b3_ref[...], 0.0).astype(o_ref.dtype)


def student_net_forward(x, params, *, tb=256):
    """x: (B, 1, 28, 28) float32 (NCHW, like torch).  Returns (B, 10) float32."""
    w1, b1, w2, b2, w3, b3 = params
    B = x.shape[0]
    x_flat = x.reshape(B, D_IN)                         # torch.flatten(x, 1)

    # Batch tile: multiple of 128 (MXU M dim / sublane friendly). Tiny batches
    # are padded to one full tile so vregs / the systolic array are not empty.
    TB = tb if B > 128 else 128
    B_pad = _round_up(B, TB)
    x_pad = jnp.pad(x_flat, ((0, B_pad - B), (0, 0)))

    # Lane-dense output: pad last layer 10 -> 128 with zero columns (exact zeros
    # in the padded logits, sliced off below).
    w3p = jnp.pad(w3, ((0, 0), (0, D_OUT_PAD - D_OUT)))
    b3p = jnp.pad(b3, ((0, 0), (0, D_OUT_PAD - D_OUT)))

    # bf16 data movement, f32 accumulation; biases stay f32.
    x_bf = x_pad.astype(jnp.bfloat16)
    w1b = w1.astype(jnp.bfloat16)
    w2b = w2.astype(jnp.bfloat16)
    w3b = w3p.astype(jnp.bfloat16)

    grid = (B_pad // TB,)
    resident = lambda shape: pl.BlockSpec(shape, lambda i: (0, 0))

    flops = 2 * B_pad * (D_IN * D_H1 + D_H1 * D_H2 + D_H2 * D_OUT_PAD)
    bytes_accessed = (
        B_pad * D_IN * 2                                          # x (bf16)
        + (D_IN * D_H1 + D_H1 * D_H2 + D_H2 * D_OUT_PAD) * 2      # weights (bf16)
        + (D_H1 + D_H2 + D_OUT_PAD) * 4                           # biases (f32)
        + B_pad * D_OUT_PAD * 4                                   # output (f32)
    )

    out = pl.pallas_call(
        _mlp_kernel,
        out_shape=jax.ShapeDtypeStruct((B_pad, D_OUT_PAD), jnp.float32),
        grid=grid,
        in_specs=[
            pl.BlockSpec((TB, D_IN), lambda i: (i, 0)),   # x streamed per batch tile
            resident((D_IN, D_H1)), resident((1, D_H1)),
            resident((D_H1, D_H2)), resident((1, D_H2)),
            resident((D_H2, D_OUT_PAD)), resident((1, D_OUT_PAD)),
        ],
        out_specs=pl.BlockSpec((TB, D_OUT_PAD), lambda i: (i, 0)),
        compiler_params=pltpu.CompilerParams(
            dimension_semantics=("parallel",),       # batch tiles across TCs (v7x)
            vmem_limit_bytes=32 * 1024 * 1024,       # safe on v7x's 64 MiB VMEM
        ),
        cost_estimate=pl.CostEstimate(
            flops=flops, transcendentals=0, bytes_accessed=bytes_accessed),
    )(x_bf, w1b, b1, w2b, b2, w3b, b3p)

    return out[:B, :D_OUT]


def init_params(key):
    """Deterministic init matching nn.Linear shapes (stored transposed: (in, out))."""
    k1, k2, k3, k4, k5, k6 = jax.random.split(key, 6)

    def linear_init(kw, kb, fan_in, fan_out):
        bound = 1.0 / jnp.sqrt(fan_in)
        w = jax.random.uniform(kw, (fan_in, fan_out), jnp.float32, -bound, bound)
        b = jax.random.uniform(kb, (1, fan_out), jnp.float32, -bound, bound)
        return w, b

    w1, b1 = linear_init(k1, k2, D_IN, D_H1)
    w2, b2 = linear_init(k3, k4, D_H1, D_H2)
    w3, b3 = linear_init(k5, k6, D_H2, D_OUT)
    return (w1, b1, w2, b2, w3, b3)


def reference_forward_f32(x, params):
    """Plain-JAX f32 reference (original module semantics)."""
    w1, b1, w2, b2, w3, b3 = params
    h = x.reshape(x.shape[0], -1)
    h = jnp.maximum(h @ w1 + b1, 0.0)
    h = jnp.maximum(h @ w2 + b2, 0.0)
    return jnp.maximum(h @ w3 + b3, 0.0)


def reference_forward_bf16(x, params):
    """Plain-JAX reference mirroring the kernel's mixed precision (bf16 in, f32 acc)."""
    w1, b1, w2, b2, w3, b3 = params
    bf = jnp.bfloat16
    h = x.reshape(x.shape[0], -1).astype(bf)
    h = jnp.maximum(
        jnp.dot(h, w1.astype(bf), preferred_element_type=jnp.float32) + b1, 0.0)
    h = jnp.maximum(
        jnp.dot(h.astype(bf), w2.astype(bf), preferred_element_type=jnp.float32) + b2, 0.0)
    return jnp.maximum(
        jnp.dot(h.astype(bf), w3.astype(bf), preferred_element_type=jnp.float32) + b3, 0.0)


if __name__ == "__main__":
    key = jax.random.PRNGKey(0)
    kx, kp = jax.random.split(key)
    B = 2
    x = jax.random.normal(kx, (B, 1, 28, 28), jnp.float32)  # NCHW, like MNIST input
    params = init_params(kp)

    out = student_net_forward(x, params)
    out = jax.block_until_ready(out)
    assert out.shape == (B, 10), out.shape

    # Tight check vs a reference with identical numerics (bf16 operands, f32 acc).
    ref_bf16 = reference_forward_bf16(x, params)
    assert jnp.allclose(out, ref_bf16, atol=2e-3, rtol=2e-3), "mismatch vs bf16 reference"

    # Looser sanity check vs the full-f32 reference (bf16 rounding tolerance).
    ref_f32 = reference_forward_f32(x, params)
    assert jnp.allclose(out, ref_f32, atol=5e-2, rtol=5e-2), "mismatch vs f32 reference"

    print("KERNEL_OK")
</pallas_src>

<mosaic_0001>
module attributes {stable_mosaic.version = 11 : i64} {
  func.func @_mlp_kernel(%arg0: i32, %arg1: memref<128x784xbf16, #tpu.memory_space<vmem>>, %arg2: memref<784x128xbf16, #tpu.memory_space<vmem>>, %arg3: memref<1x128xf32, #tpu.memory_space<vmem>>, %arg4: memref<128x64xbf16, #tpu.memory_space<vmem>>, %arg5: memref<1x64xf32, #tpu.memory_space<vmem>>, %arg6: memref<64x128xbf16, #tpu.memory_space<vmem>>, %arg7: memref<1x128xf32, #tpu.memory_space<vmem>>, %arg8: memref<128x128xf32, #tpu.memory_space<vmem>>) attributes {dimension_semantics = [#tpu.dimension_semantics<parallel>], iteration_bounds = array<i64: 1>, scalar_prefetch = 0 : i64, scratch_operands = 0 : i64, tpu.core_type = #tpu.core_type<tc>, window_params = [{transform_indices = @transform_0, window_bounds = array<i64: 128, 784>}, {pipeline_mode = #tpu.pipeline_mode<synchronous>, transform_indices = @transform_1, window_bounds = array<i64: 784, 128>}, {pipeline_mode = #tpu.pipeline_mode<synchronous>, transform_indices = @transform_2, window_bounds = array<i64: 1, 128>}, {pipeline_mode = #tpu.pipeline_mode<synchronous>, transform_indices = @transform_3, window_bounds = array<i64: 128, 64>}, {pipeline_mode = #tpu.pipeline_mode<synchronous>, transform_indices = @transform_4, window_bounds = array<i64: 1, 64>}, {pipeline_mode = #tpu.pipeline_mode<synchronous>, transform_indices = @transform_5, window_bounds = array<i64: 64, 128>}, {pipeline_mode = #tpu.pipeline_mode<synchronous>, transform_indices = @transform_6, window_bounds = array<i64: 1, 128>}, {transform_indices = @transform_7, window_bounds = array<i64: 128, 128>}]} {
    %c0 = arith.constant 0 : index
    %c0_0 = arith.constant 0 : index
    %0 = vector.load %arg1[%c0, %c0_0] : memref<128x784xbf16, #tpu.memory_space<vmem>>, vector<128x784xbf16>
    %c0_1 = arith.constant 0 : index
    %c0_2 = arith.constant 0 : index
    %1 = vector.load %arg2[%c0_1, %c0_2] : memref<784x128xbf16, #tpu.memory_space<vmem>>, vector<784x128xbf16>
    %cst = arith.constant dense<0.000000e+00> : vector<128x128xf32>
    %2 = tpu.matmul %0, %1, %cst {dimension_numbers = #tpu.dot_dimension_numbers<[1], [0], [0], [1], [0, 0, 1, 1], [], []>} : vector<128x784xbf16>, vector<784x128xbf16>, vector<128x128xf32> -> vector<128x128xf32>
    %c0_3 = arith.constant 0 : index
    %c0_4 = arith.constant 0 : index
    %3 = vector.load %arg3[%c0_3, %c0_4] : memref<1x128xf32, #tpu.memory_space<vmem>>, vector<1x128xf32>
    %4 = vector.broadcast %3 : vector<1x128xf32> to vector<128x128xf32>
    %5 = arith.addf %2, %4 : vector<128x128xf32>
    %cst_5 = arith.constant 0.000000e+00 : f32
    %6 = vector.broadcast %cst_5 : f32 to vector<128x128xf32>
    %7 = arith.maximumf %5, %6 : vector<128x128xf32>
    %8 = arith.truncf %7 : vector<128x128xf32> to vector<128x128xbf16>
    %c0_6 = arith.constant 0 : index
    %c0_7 = arith.constant 0 : index
    %9 = vector.load %arg4[%c0_6, %c0_7] : memref<128x64xbf16, #tpu.memory_space<vmem>>, vector<128x64xbf16>
    %cst_8 = arith.constant dense<0.000000e+00> : vector<128x64xf32>
    %10 = tpu.matmul %8, %9, %cst_8 {dimension_numbers = #tpu.dot_dimension_numbers<[1], [0], [0], [1], [0, 0, 1, 1], [], []>} : vector<128x128xbf16>, vector<128x64xbf16>, vector<128x64xf32> -> vector<128x64xf32>
    %c0_9 = arith.constant 0 : index
    %c0_10 = arith.constant 0 : index
    %11 = vector.load %arg5[%c0_9, %c0_10] : memref<1x64xf32, #tpu.memory_space<vmem>>, vector<1x64xf32>
    %12 = vector.broadcast %11 : vector<1x64xf32> to vector<128x64xf32>
    %13 = arith.addf %10, %12 : vector<128x64xf32>
    %cst_11 = arith.constant 0.000000e+00 : f32
    %14 = vector.broadcast %cst_11 : f32 to vector<128x64xf32>
    %15 = arith.maximumf %13, %14 : vector<128x64xf32>
    %16 = arith.truncf %15 : vector<128x64xf32> to vector<128x64xbf16>
    %c0_12 = arith.constant 0 : index
    %c0_13 = arith.constant 0 : index
    %17 = vector.load %arg6[%c0_12, %c0_13] : memref<64x128xbf16, #tpu.memory_space<vmem>>, vector<64x128xbf16>
    %cst_14 = arith.constant dense<0.000000e+00> : vector<128x128xf32>
    %18 = tpu.matmul %16, %17, %cst_14 {dimension_numbers = #tpu.dot_dimension_numbers<[1], [0], [0], [1], [0, 0, 1, 1], [], []>} : vector<128x64xbf16>, vector<64x128xbf16>, vector<128x128xf32> -> vector<128x128xf32>
    %c0_15 = arith.constant 0 : index
    %c0_16 = arith.constant 0 : index
    %19 = vector.load %arg7[%c0_15, %c0_16] : memref<1x128xf32, #tpu.memory_space<vmem>>, vector<1x128xf32>
    %20 = vector.broadcast %19 : vector<1x128xf32> to vector<128x128xf32>
    %21 = arith.addf %18, %20 : vector<128x128xf32>
    %cst_17 = arith.constant 0.000000e+00 : f32
    %22 = vector.broadcast %cst_17 : f32 to vector<128x128xf32>
    %23 = arith.maximumf %21, %22 : vector<128x128xf32>
    %c0_18 = arith.constant 0 : index
    %c0_19 = arith.constant 0 : index
    %24 = vector.load %arg8[%c0_18, %c0_19] : memref<128x128xf32, #tpu.memory_space<vmem>>, vector<128x128xf32>
    tpu.vector_store %arg8[%c0_18, %c0_19], %23 {strides = array<i32>} : memref<128x128xf32, #tpu.memory_space<vmem>>, vector<128x128xf32>,
    return
  }
  func.func @transform_0(%arg0: i32) -> (i32, i32) {
    %c0_i32 = arith.constant 0 : i32
    %c0_i32_0 = arith.constant 0 : i32
    return %arg0, %c0_i32 : i32, i32
  }
  func.func @transform_1(%arg0: i32) -> (i32, i32) {
    %c0_i32 = arith.constant 0 : i32
    %c0_i32_0 = arith.constant 0 : i32
    %c0_i32_1 = arith.constant 0 : i32
    return %c0_i32, %c0_i32_0 : i32, i32
  }
  func.func @transform_2(%arg0: i32) -> (i32, i32) {
    %c0_i32 = arith.constant 0 : i32
    %c0_i32_0 = arith.constant 0 : i32
    %c0_i32_1 = arith.constant 0 : i32
    return %c0_i32, %c0_i32_0 : i32, i32
  }
  func.func @transform_3(%arg0: i32) -> (i32, i32) {
    %c0_i32 = arith.constant 0 : i32
    %c0_i32_0 = arith.constant 0 : i32
    %c0_i32_1 = arith.constant 0 : i32
    return %c0_i32, %c0_i32_0 : i32, i32
  }
  func.func @transform_4(%arg0: i32) -> (i32, i32) {
    %c0_i32 = arith.constant 0 : i32
    %c0_i32_0 = arith.constant 0 : i32
    %c0_i32_1 = arith.constant 0 : i32
    return %c0_i32, %c0_i32_0 : i32, i32
  }
  func.func @transform_5(%arg0: i32) -> (i32, i32) {
    %c0_i32 = arith.constant 0 : i32
    %c0_i32_0 = arith.constant 0 : i32
    %c0_i32_1 = arith.constant 0 : i32
    return %c0_i32, %c0_i32_0 : i32, i32
  }
  func.func @transform_6(%arg0: i32) -> (i32, i32) {
    %c0_i32 = arith.constant 0 : i32
    %c0_i32_0 = arith.constant 0 : i32
    %c0_i32_1 = arith.constant 0 : i32
    return %c0_i32, %c0_i32_0 : i32, i32
  }
  func.func @transform_7(%arg0: i32) -> (i32, i32) {
    %c0_i32 = arith.constant 0 : i32
    %c0_i32_0 = arith.constant 0 : i32
    return %arg0, %c0_i32 : i32, i32
  }
}

</mosaic_0001>

<llo_original>
// kernel: tpu_custom_call.1
$region0: #{tpu_custom_call.1}
  #allocation0 [shape = 'u32[]', space=smem, size = 0x4, offset = 0x4, fixed_abs, tag = 'smem constant byte address 0x4 - core index']
  #allocation1 [shape = 'u32[144,128]{1,0:T(1,128)}', space=vmem, size = 0x12000, scoped, tag = 'internal scratch']
  %s0 = inlined_call_operand.vmem [shape: bf16[128,784], index: 0, kind: input, shape index: {}]
  %s1 = inlined_call_operand.vmem [shape: bf16[784,128], index: 1, kind: input, shape index: {}]
  %s2 = inlined_call_operand.vmem [shape: f32[1,128], index: 2, kind: input, shape index: {}]
  %s3 = inlined_call_operand.vmem [shape: bf16[128,64], index: 3, kind: input, shape index: {}]
  %s4 = inlined_call_operand.vmem [shape: f32[1,64], index: 4, kind: input, shape index: {}]
  %s5 = inlined_call_operand.vmem [shape: bf16[64,128], index: 5, kind: input, shape index: {}]
  %s6 = inlined_call_operand.vmem [shape: f32[1,128], index: 6, kind: input, shape index: {}]
  %s7 = inlined_call_operand.hbm [shape: f32[128,128], index: 7, kind: output, shape index: {}]
  %s8 = sld [smem:[#allocation0]]
  $region38: #{tpu_custom_call.1} parent=0
    _
  %s10 = ssub.s32 1, %s8
  %s11 = scalar_select 0, %s10, %s8
  $region1: #{tpu_custom_call.1} parent=0
    #allocation2 [shape = 'u8[65536]{0}', space=vmem, size = 0x10000, scoped, tag = 'output window, operand 0, single buffered']
    #allocation3 [shape = 's32[1]{0}', space=sflag, size = 0x4, scoped, tag = 'scoped memory for tpu_custom_call.1']
    %12 = vsyncpa [#allocation3], 0
    // Predicated region
    $region2: #{tpu_custom_call.1} parent=1 // pred_check
      _
    $region3: #{tpu_custom_call.1} parent=1 // pred_check_branch
      %14 = sbr.rel (0) target = $region5
    $region4: #{tpu_custom_call.1} parent=1 // pred_region
      _
    $region5: #{tpu_custom_call.1} parent=1 // pred_fallthru
      _
    // Predicated region
    $region6: #{tpu_custom_call.1} parent=1 // pred_check
      _
    $region7: #{tpu_custom_call.1} parent=1 // pred_check_branch
      %16 = sbr.rel (0) target = $region9
    $region8: #{tpu_custom_call.1} parent=1 // pred_region
      _
    $region9: #{tpu_custom_call.1} parent=1 // pred_fallthru
      _
    // Predicated region
    $region10: #{tpu_custom_call.1} parent=1 // pred_check
      _
    $region11: #{tpu_custom_call.1} parent=1 // pred_check_branch
      %18 = sbr.rel (0) target = $region13
    $region12: #{tpu_custom_call.1} parent=1 // pred_region
      _
    $region13: #{tpu_custom_call.1} parent=1 // pred_fallthru
      _
    // Predicated region
    $region14: #{tpu_custom_call.1} parent=1 // pred_check
      _
    $region15: #{tpu_custom_call.1} parent=1 // pred_check_branch
      %20 = sbr.rel (0) target = $region17
    $region16: #{tpu_custom_call.1} parent=1 // pred_region
      _
    $region17: #{tpu_custom_call.1} parent=1 // pred_fallthru
      _
    // Predicated region
    $region18: #{tpu_custom_call.1} parent=1 // pred_check
      _
    $region19: #{tpu_custom_call.1} parent=1 // pred_check_branch
      %22 = sbr.rel (0) target = $region21
    $region20: #{tpu_custom_call.1} parent=1 // pred_region
      _
    $region21: #{tpu_custom_call.1} parent=1 // pred_fallthru
      _
    // Predicated region
    $region22: #{tpu_custom_call.1} parent=1 // pred_check
      _
    $region23: #{tpu_custom_call.1} parent=1 // pred_check_branch
      %24 = sbr.rel (0) target = $region25
    $region24: #{tpu_custom_call.1} parent=1 // pred_region
      _
    $region25: #{tpu_custom_call.1} parent=1 // pred_fallthru
      _
    // Predicated region
    $region26: #{tpu_custom_call.1} parent=1 // pred_check
      _
    $region27: #{tpu_custom_call.1} parent=1 // pred_check_branch
      %26 = sbr.rel (0) target = $region29
    $region28: #{tpu_custom_call.1} parent=1 // pred_region
      _
    $region29: #{tpu_custom_call.1} parent=1 // pred_fallthru
      _
    %v28 = vld [vmem:[%s0] sm:$0xff]
    %v29 = vld [vmem:[%s0 + $0x8] sm:$0xff]
    %v30 = vld [vmem:[%s0 + $0x10] sm:$0xff]
    %v31 = vld [vmem:[%s0 + $0x18] sm:$0xf]
    %v32 = vld [vmem:[%s0 + $0x1c] sm:$0xff]
    %v33 = vld [vmem:[%s0 + $0x24] sm:$0xff]
    %v34 = vld [vmem:[%s0 + $0x2c] sm:$0xff]
    %v35 = vld [vmem:[%s0 + $0x34] sm:$0xf]
    %v36 = vld [vmem:[%s0 + $0x38] sm:$0xff]
    %v37 = vld [vmem:[%s0 + $0x40] sm:$0xff]
    %v38 = vld [vmem:[%s0 + $0x48] sm:$0xff]
    %v39 = vld [vmem:[%s0 + $0x50] sm:$0xf]
    %v40 = vld [vmem:[%s0 + $0x54] sm:$0xff]
    %v41 = vld [vmem:[%s0 + $0x5c] sm:$0xff]
    %v42 = vld [vmem:[%s0 + $0x64] sm:$0xff]
    %v43 = vld [vmem:[%s0 + $0x6c] sm:$0xf]
    %v44 = vld [vmem:[%s0 + $0x70] sm:$0xff]
    %v45 = vld [vmem:[%s0 + $0x78] sm:$0xff]
    %v46 = vld [vmem:[%s0 + $0x80] sm:$0xff]
    %v47 = vld [vmem:[%s0 + $0x88] sm:$0xf]
    %v48 = vld [vmem:[%s0 + $0x8c] sm:$0xff]
    %v49 = vld [vmem:[%s0 + $0x94] sm:$0xff]
    %v50 = vld [vmem:[%s0 + $0x9c] sm:$0xff]
    %v51 = vld [vmem:[%s0 + $0xa4] sm:$0xf]
    %v52 = vld [vmem:[%s0 + $0xa8] sm:$0xff]
    %v53 = vld [vmem:[%s0 + $0xb0] sm:$0xff]
    %v54 = vld [vmem:[%s0 + $0xb8] sm:$0xff]
    %v55 = vld [vmem:[%s0 + $0xc0] sm:$0xf]
    %v56 = vld [vmem:[%s0 + $0xc4] sm:$0xff]
    %v57 = vld [vmem:[%s0 + $0xcc] sm:$0xff]
    %v58 = vld [vmem:[%s0 + $0xd4] sm:$0xff]
    %v59 = vld [vmem:[%s0 + $0xdc] sm:$0xf]
    %v60 = vld [vmem:[%s0 + $0xe0] sm:$0xff]
    %v61 = vld [vmem:[%s0 + $0xe8] sm:$0xff]
    %v62 = vld [vmem:[%s0 + $0xf0] sm:$0xff]
    %v63 = vld [vmem:[%s0 + $0xf8] sm:$0xf]
    %v64 = vld [vmem:[%s0 + $0xfc] sm:$0xff]
    %v65 = vld [vmem:[%s0 + $0x104] sm:$0xff]
    %v66 = vld [vmem:[%s0 + $0x10c] sm:$0xff]
    %v67 = vld [vmem:[%s0 + $0x114] sm:$0xf]
    %v68 = vld [vmem:[%s0 + $0x118] sm:$0xff]
    %v69 = vld [vmem:[%s0 + $0x120] sm:$0xff]
    %v70 = vld [vmem:[%s0 + $0x128] sm:$0xff]
    %v71 = vld [vmem:[%s0 + $0x130] sm:$0xf]
    %v72 = vld [vmem:[%s0 + $0x134] sm:$0xff]
    %v73 = vld [vmem:[%s0 + $0x13c] sm:$0xff]
    %v74 = vld [vmem:[%s0 + $0x144] sm:$0xff]
    %v75 = vld [vmem:[%s0 + $0x14c] sm:$0xf]
    %v76 = vld [vmem:[%s0 + $0x150] sm:$0xff]
    %v77 = vld [vmem:[%s0 + $0x158] sm:$0xff]
    %v78 = vld [vmem:[%s0 + $0x160] sm:$0xff]
    %v79 = vld [vmem:[%s0 + $0x168] sm:$0xf]
    %v80 = vld [vmem:[%s0 + $0x16c] sm:$0xff]
    %v81 = vld [vmem:[%s0 + $0x174] sm:$0xff]
    %v82 = vld [vmem:[%s0 + $0x17c] sm:$0xff]
    %v83 = vld [vmem:[%s0 + $0x184] sm:$0xf]
    %v84 = vld [vmem:[%s0 + $0x188] sm:$0xff]
    %v85 = vld [vmem:[%s0 + $0x190] sm:$0xff]
    %v86 = vld [vmem:[%s0 + $0x198] sm:$0xff]
    %v87 = vld [vmem:[%s0 + $0x1a0] sm:$0xf]
    %v88 = vld [vmem:[%s0 + $0x1a4] sm:$0xff]
    %v89 = vld [vmem:[%s0 + $0x1ac] sm:$0xff]
    %v90 = vld [vmem:[%s0 + $0x1b4] sm:$0xff]
    %v91 = vld [vmem:[%s0 + $0x1bc] sm:$0xf]
    %v92 = vld [vmem:[%s1] sm:$0xf]
    %v93 = vld [vmem:[%s1 + $0x4] sm:$0xf]
    %v94 = vld [vmem:[%s1 + $0x8] sm:$0xf]
    %v95 = vld [vmem:[%s1 + $0xc] sm:$0xf]
    %v96 = vld [vmem:[%s1 + $0x10] sm:$0xf]
    %v97 = vld [vmem:[%s1 + $0x14] sm:$0xf]
    %v98 = vld [vmem:[%s1 + $0x18] sm:$0xf]
    %v99 = vld [vmem:[%s1 + $0x1c] sm:$0xf]
    %v100 = vld [vmem:[%s1 + $0x20] sm:$0xf]
    %v101 = vld [vmem:[%s1 + $0x24] sm:$0xf]
    %v102 = vld [vmem:[%s1 + $0x28] sm:$0xf]
    %v103 = vld [vmem:[%s1 + $0x2c] sm:$0xf]
    %v104 = vld [vmem:[%s1 + $0x30] sm:$0xf]
    %v105 = vld [vmem:[%s1 + $0x34] sm:$0xf]
    %v106 = vld [vmem:[%s1 + $0x38] sm:$0xf]
    %v107 = vld [vmem:[%s1 + $0x3c] sm:$0xf]
    %v108 = vld [vmem:[%s1 + $0x40] sm:$0xf]
    %v109 = vld [vmem:[%s1 + $0x44] sm:$0xf]
    %v110 = vld [vmem:[%s1 + $0x48] sm:$0xf]
    %v111 = vld [vmem:[%s1 + $0x4c] sm:$0xf]
    %v112 = vld [vmem:[%s1 + $0x50] sm:$0xf]
    %v113 = vld [vmem:[%s1 + $0x54] sm:$0xf]
    %v114 = vld [vmem:[%s1 + $0x58] sm:$0xf]
    %v115 = vld [vmem:[%s1 + $0x5c] sm:$0xf]
    %v116 = vld [vmem:[%s1 + $0x60] sm:$0xf]
    %v117 = vld [vmem:[%s1 + $0x64] sm:$0xf]
    %v118 = vld [vmem:[%s1 + $0x68] sm:$0xf]
    %v119 = vld [vmem:[%s1 + $0x6c] sm:$0xf]
    %v120 = vld [vmem:[%s1 + $0x70] sm:$0xf]
    %v121 = vld [vmem:[%s1 + $0x74] sm:$0xf]
    %v122 = vld [vmem:[%s1 + $0x78] sm:$0xf]
    %v123 = vld [vmem:[%s1 + $0x7c] sm:$0xf]
    %v124 = vld [vmem:[%s1 + $0x80] sm:$0xf]
    %v125 = vld [vmem:[%s1 + $0x84] sm:$0xf]
    %v126 = vld [vmem:[%s1 + $0x88] sm:$0xf]
    %v127 = vld [vmem:[%s1 + $0x8c] sm:$0xf]
    %v128 = vld [vmem:[%s1 + $0x90] sm:$0xf]
    %v129 = vld [vmem:[%s1 + $0x94] sm:$0xf]
    %v130 = vld [vmem:[%s1 + $0x98] sm:$0xf]
    %v131 = vld [vmem:[%s1 + $0x9c] sm:$0xf]
    %v132 = vld [vmem:[%s1 + $0xa0] sm:$0xf]
    %v133 = vld [vmem:[%s1 + $0xa4] sm:$0xf]
    %v134 = vld [vmem:[%s1 + $0xa8] sm:$0xf]
    %v135 = vld [vmem:[%s1 + $0xac] sm:$0xf]
    %v136 = vld [vmem:[%s1 + $0xb0] sm:$0xf]
    %v137 = vld [vmem:[%s1 + $0xb4] sm:$0xf]
    %v138 = vld [vmem:[%s1 + $0xb8] sm:$0xf]
    %v139 = vld [vmem:[%s1 + $0xbc] sm:$0xf]
    %v140 = vld [vmem:[%s1 + $0xc0] sm:$0xf]
    %v141 = vld [vmem:[%s1 + $0xc4] sm:$0xf]
    %v142 = vld [vmem:[%s1 + $0xc8] sm:$0xf]
    %v143 = vld [vmem:[%s1 + $0xcc] sm:$0xf]
    %v144 = vld [vmem:[%s1 + $0xd0] sm:$0xf]
    %v145 = vld [vmem:[%s1 + $0xd4] sm:$0xf]
    %v146 = vld [vmem:[%s1 + $0xd8] sm:$0xf]
    %v147 = vld [vmem:[%s1 + $0xdc] sm:$0xf]
    %v148 = vld [vmem:[%s1 + $0xe0] sm:$0xf]
    %v149 = vld [vmem:[%s1 + $0xe4] sm:$0xf]
    %v150 = vld [vmem:[%s1 + $0xe8] sm:$0xf]
    %v151 = vld [vmem:[%s1 + $0xec] sm:$0xf]
    %v152 = vld [vmem:[%s1 + $0xf0] sm:$0xf]
    %v153 = vld [vmem:[%s1 + $0xf4] sm:$0xf]
    %v154 = vld [vmem:[%s1 + $0xf8] sm:$0xf]
    %v155 = vld [vmem:[%s1 + $0xfc] sm:$0xf]
    %v156 = vld [vmem:[%s1 + $0x100] sm:$0xf]
    %v157 = vld [vmem:[%s1 + $0x104] sm:$0xf]
    %v158 = vld [vmem:[%s1 + $0x108] sm:$0xf]
    %v159 = vld [vmem:[%s1 + $0x10c] sm:$0xf]
    %v160 = vld [vmem:[%s1 + $0x110] sm:$0xf]
    %v161 = vld [vmem:[%s1 + $0x114] sm:$0xf]
    %v162 = vld [vmem:[%s1 + $0x118] sm:$0xf]
    %v163 = vld [vmem:[%s1 + $0x11c] sm:$0xf]
    %v164 = vld [vmem:[%s1 + $0x120] sm:$0xf]
    %v165 = vld [vmem:[%s1 + $0x124] sm:$0xf]
    %v166 = vld [vmem:[%s1 + $0x128] sm:$0xf]
    %v167 = vld [vmem:[%s1 + $0x12c] sm:$0xf]
    %v168 = vld [vmem:[%s1 + $0x130] sm:$0xf]
    %v169 = vld [vmem:[%s1 + $0x134] sm:$0xf]
    %v170 = vld [vmem:[%s1 + $0x138] sm:$0xf]
    %v171 = vld [vmem:[%s1 + $0x13c] sm:$0xf]
    %v172 = vld [vmem:[%s1 + $0x140] sm:$0xf]
    %v173 = vld [vmem:[%s1 + $0x144] sm:$0xf]
    %v174 = vld [vmem:[%s1 + $0x148] sm:$0xf]
    %v175 = vld [vmem:[%s1 + $0x14c] sm:$0xf]
    %v176 = vld [vmem:[%s1 + $0x150] sm:$0xf]
    %v177 = vld [vmem:[%s1 + $0x154] sm:$0xf]
    %v178 = vld [vmem:[%s1 + $0x158] sm:$0xf]
    %v179 = vld [vmem:[%s1 + $0x15c] sm:$0xf]
    %v180 = vld [vmem:[%s1 + $0x160] sm:$0xf]
    %v181 = vld [vmem:[%s1 + $0x164] sm:$0xf]
    %v182 = vld [vmem:[%s1 + $0x168] sm:$0xf]
    %v183 = vld [vmem:[%s1 + $0x16c] sm:$0xf]
    %v184 = vld [vmem:[%s1 + $0x170] sm:$0xf]
    %v185 = vld [vmem:[%s1 + $0x174] sm:$0xf]
    %v186 = vld [vmem:[%s1 + $0x178] sm:$0xf]
    %v187 = vld [vmem:[%s1 + $0x17c] sm:$0xf]
    %v188 = vld [vmem:[%s1 + $0x180] sm:$0xf]
    %v189 = vld [vmem:[%s1 + $0x184] sm:$0xf]
    %v190 = vld [vmem:[%s2] sm:$0x1]
    %v192 = vlaneseq
    %v193 = vshrl.u32 %v192, 7
    %v194 = vsub.s32 0, %v193
    %v195 = vrot.slane %v190, %v194
    %v261 = vunpack.c.l.b16 %v28
    %v262 = vunpack.c.h.b16 %v28
    %v263 = vunpack.c.l.b16 %v29
    %v264 = vunpack.c.h.b16 %v29
    %v265 = vunpack.c.l.b16 %v30
    %v266 = vunpack.c.h.b16 %v30
    %v267 = vunpack.c.l.b16 %v31
    %v268 = vunpack.c.l.b16 %v32
    %v269 = vunpack.c.h.b16 %v32
    %v270 = vunpack.c.l.b16 %v33
    %v271 = vunpack.c.h.b16 %v33
    %v272 = vunpack.c.l.b16 %v34
    %v273 = vunpack.c.h.b16 %v34
    %v274 = vunpack.c.l.b16 %v35
    %v275 = vunpack.c.l.b16 %v36
    %v276 = vunpack.c.h.b16 %v36
    %v277 = vunpack.c.l.b16 %v37
    %v278 = vunpack.c.h.b16 %v37
    %v279 = vunpack.c.l.b16 %v38
    %v280 = vunpack.c.h.b16 %v38
    %v281 = vunpack.c.l.b16 %v39
    %v282 = vunpack.c.l.b16 %v40
    %v283 = vunpack.c.h.b16 %v40
    %v284 = vunpack.c.l.b16 %v41
    %v285 = vunpack.c.h.b16 %v41
    %v286 = vunpack.c.l.b16 %v42
    %v287 = vunpack.c.h.b16 %v42
    %v288 = vunpack.c.l.b16 %v43
    %v289 = vunpack.c.l.b16 %v44
    %v290 = vunpack.c.h.b16 %v44
    %v291 = vunpack.c.l.b16 %v45
    %v292 = vunpack.c.h.b16 %v45
    %v293 = vunpack.c.l.b16 %v46
    %v294 = vunpack.c.h.b16 %v46
    %v295 = vunpack.c.l.b16 %v47
    %v296 = vunpack.c.l.b16 %v48
    %v297 = vunpack.c.h.b16 %v48
    %v298 = vunpack.c.l.b16 %v49
    %v299 = vunpack.c.h.b16 %v49
    %v300 = vunpack.c.l.b16 %v50
    %v301 = vunpack.c.h.b16 %v50
    %v302 = vunpack.c.l.b16 %v51
    %v303 = vunpack.c.l.b16 %v52
    %v304 = vunpack.c.h.b16 %v52
    %v305 = vunpack.c.l.b16 %v53
    %v306 = vunpack.c.h.b16 %v53
    %v307 = vunpack.c.l.b16 %v54
    %v308 = vunpack.c.h.b16 %v54
    %v309 = vunpack.c.l.b16 %v55
    %v310 = vunpack.c.l.b16 %v56
    %v311 = vunpack.c.h.b16 %v56
    %v312 = vunpack.c.l.b16 %v57
    %v313 = vunpack.c.h.b16 %v57
    %v314 = vunpack.c.l.b16 %v58
    %v315 = vunpack.c.h.b16 %v58
    %v316 = vunpack.c.l.b16 %v59
    %v317 = vunpack.c.l.b16 %v60
    %v318 = vunpack.c.h.b16 %v60
    %v319 = vunpack.c.l.b16 %v61
    %v320 = vunpack.c.h.b16 %v61
    %v321 = vunpack.c.l.b16 %v62
    %v322 = vunpack.c.h.b16 %v62
    %v323 = vunpack.c.l.b16 %v63
    %v324 = vunpack.c.l.b16 %v64
    %v325 = vunpack.c.h.b16 %v64
    %v326 = vunpack.c.l.b16 %v65
    %v327 = vunpack.c.h.b16 %v65
    %v328 = vunpack.c.l.b16 %v66
    %v329 = vunpack.c.h.b16 %v66
    %v330 = vunpack.c.l.b16 %v67
    %v331 = vunpack.c.l.b16 %v68
    %v332 = vunpack.c.h.b16 %v68
    %v333 = vunpack.c.l.b16 %v69
    %v334 = vunpack.c.h.b16 %v69
    %v335 = vunpack.c.l.b16 %v70
    %v336 = vunpack.c.h.b16 %v70
    %v337 = vunpack.c.l.b16 %v71
    %v338 = vunpack.c.l.b16 %v72
    %v339 = vunpack.c.h.b16 %v72
    %v340 = vunpack.c.l.b16 %v73
    %v341 = vunpack.c.h.b16 %v73
    %v342 = vunpack.c.l.b16 %v74
    %v343 = vunpack.c.h.b16 %v74
    %v344 = vunpack.c.l.b16 %v75
    %v345 = vunpack.c.l.b16 %v76
    %v346 = vunpack.c.h.b16 %v76
    %v347 = vunpack.c.l.b16 %v77
    %v348 = vunpack.c.h.b16 %v77
    %v349 = vunpack.c.l.b16 %v78
    %v350 = vunpack.c.h.b16 %v78
    %v351 = vunpack.c.l.b16 %v79
    %v352 = vunpack.c.l.b16 %v80
    %v353 = vunpack.c.h.b16 %v80
    %v354 = vunpack.c.l.b16 %v81
    %v355 = vunpack.c.h.b16 %v81
    %v356 = vunpack.c.l.b16 %v82
    %v357 = vunpack.c.h.b16 %v82
    %v358 = vunpack.c.l.b16 %v83
    %v359 = vunpack.c.l.b16 %v84
    %v360 = vunpack.c.h.b16 %v84
    %v361 = vunpack.c.l.b16 %v85
    %v362 = vunpack.c.h.b16 %v85
    %v363 = vunpack.c.l.b16 %v86
    %v364 = vunpack.c.h.b16 %v86
    %v365 = vunpack.c.l.b16 %v87
    %v366 = vunpack.c.l.b16 %v88
    %v367 = vunpack.c.h.b16 %v88
    %v368 = vunpack.c.l.b16 %v89
    %v369 = vunpack.c.h.b16 %v89
    %v370 = vunpack.c.l.b16 %v90
    %v371 = vunpack.c.h.b16 %v90
    %v372 = vunpack.c.l.b16 %v91
    %v373 = vpack.c.b16 %v268, %v261
    %v374 = vpack.c.b16 %v269, %v262
    %v375 = vpack.c.b16 %v270, %v263
    %v376 = vpack.c.b16 %v271, %v264
    %v377 = vpack.c.b16 %v272, %v265
    %v378 = vpack.c.b16 %v273, %v266
    %v379 = vpack.c.b16 %v274, %v267
    %v380 = vpack.c.b16 %v282, %v275
    %v381 = vpack.c.b16 %v283, %v276
    %v382 = vpack.c.b16 %v284, %v277
    %v383 = vpack.c.b16 %v285, %v278
    %v384 = vpack.c.b16 %v286, %v279
    %v385 = vpack.c.b16 %v287, %v280
    %v386 = vpack.c.b16 %v288, %v281
    %v387 = vpack.c.b16 %v296, %v289
    %v388 = vpack.c.b16 %v297, %v290
    %v389 = vpack.c.b16 %v298, %v291
    %v390 = vpack.c.b16 %v299, %v292
    %v391 = vpack.c.b16 %v300, %v293
    %v392 = vpack.c.b16 %v301, %v294
    %v393 = vpack.c.b16 %v302, %v295
    %v394 = vpack.c.b16 %v310, %v303
    %v395 = vpack.c.b16 %v311, %v304
    %v396 = vpack.c.b16 %v312, %v305
    %v397 = vpack.c.b16 %v313, %v306
    %v398 = vpack.c.b16 %v314, %v307
    %v399 = vpack.c.b16 %v315, %v308
    %v400 = vpack.c.b16 %v316, %v309
    %v401 = vpack.c.b16 %v324, %v317
    %v402 = vpack.c.b16 %v325, %v318
    %v403 = vpack.c.b16 %v326, %v319
    %v404 = vpack.c.b16 %v327, %v320
    %v405 = vpack.c.b16 %v328, %v321
    %v406 = vpack.c.b16 %v329, %v322
    %v407 = vpack.c.b16 %v330, %v323
    %v408 = vpack.c.b16 %v338, %v331
    %v409 = vpack.c.b16 %v339, %v332
    %v410 = vpack.c.b16 %v340, %v333
    %v411 = vpack.c.b16 %v341, %v334
    %v412 = vpack.c.b16 %v342, %v335
    %v413 = vpack.c.b16 %v343, %v336
    %v414 = vpack.c.b16 %v344, %v337
    %v415 = vpack.c.b16 %v352, %v345
    %v416 = vpack.c.b16 %v353, %v346
    %v417 = vpack.c.b16 %v354, %v347
    %v418 = vpack.c.b16 %v355, %v348
    %v419 = vpack.c.b16 %v356, %v349
    %v420 = vpack.c.b16 %v357, %v350
    %v421 = vpack.c.b16 %v358, %v351
    %v422 = vpack.c.b16 %v366, %v359
    %v423 = vpack.c.b16 %v367, %v360
    %v424 = vpack.c.b16 %v368, %v361
    %v425 = vpack.c.b16 %v369, %v362
    %v426 = vpack.c.b16 %v370, %v363
    %v427 = vpack.c.b16 %v371, %v364
    %v428 = vpack.c.b16 %v372, %v365
    %v575 = vunpack.c.l.b16 %v92
    %v576 = vunpack.c.l.b16 %v93
    %v577 = vunpack.c.l.b16 %v94
    %v578 = vunpack.c.l.b16 %v95
    %v579 = vunpack.c.l.b16 %v96
    %v580 = vunpack.c.l.b16 %v97
    %v581 = vunpack.c.l.b16 %v98
    %v582 = vunpack.c.l.b16 %v99
    %v583 = vunpack.c.l.b16 %v100
    %v584 = vunpack.c.l.b16 %v101
    %v585 = vunpack.c.l.b16 %v102
    %v586 = vunpack.c.l.b16 %v103
    %v587 = vunpack.c.l.b16 %v104
    %v588 = vunpack.c.l.b16 %v105
    %v589 = vunpack.c.l.b16 %v106
    %v590 = vunpack.c.l.b16 %v107
    %v591 = vunpack.c.l.b16 %v108
    %v592 = vunpack.c.l.b16 %v109
    %v593 = vunpack.c.l.b16 %v110
    %v594 = vunpack.c.l.b16 %v111
    %v595 = vunpack.c.l.b16 %v112
    %v596 = vunpack.c.l.b16 %v113
    %v597 = vunpack.c.l.b16 %v114
    %v598 = vunpack.c.l.b16 %v115
    %v599 = vunpack.c.l.b16 %v116
    %v600 = vunpack.c.l.b16 %v117
    %v601 = vunpack.c.l.b16 %v118
    %v602 = vunpack.c.l.b16 %v119
    %v603 = vunpack.c.l.b16 %v120
    %v604 = vunpack.c.l.b16 %v121
    %v605 = vunpack.c.l.b16 %v122
    %v606 = vunpack.c.l.b16 %v123
    %v607 = vunpack.c.l.b16 %v124
    %v608 = vunpack.c.l.b16 %v125
    %v609 = vunpack.c.l.b16 %v126
    %v610 = vunpack.c.l.b16 %v127
    %v611 = vunpack.c.l.b16 %v128
    %v612 = vunpack.c.l.b16 %v129
    %v613 = vunpack.c.l.b16 %v130
    %v614 = vunpack.c.l.b16 %v131
    %v615 = vunpack.c.l.b16 %v132
    %v616 = vunpack.c.l.b16 %v133
    %v617 = vunpack.c.l.b16 %v134
    %v618 = vunpack.c.l.b16 %v135
    %v619 = vunpack.c.l.b16 %v136
    %v620 = vunpack.c.l.b16 %v137
    %v621 = vunpack.c.l.b16 %v138
    %v622 = vunpack.c.l.b16 %v139
    %v623 = vunpack.c.l.b16 %v140
    %v624 = vunpack.c.l.b16 %v141
    %v625 = vunpack.c.l.b16 %v142
    %v626 = vunpack.c.l.b16 %v143
    %v627 = vunpack.c.l.b16 %v144
    %v628 = vunpack.c.l.b16 %v145
    %v629 = vunpack.c.l.b16 %v146
    %v630 = vunpack.c.l.b16 %v147
    %v631 = vunpack.c.l.b16 %v148
    %v632 = vunpack.c.l.b16 %v149
    %v633 = vunpack.c.l.b16 %v150
    %v634 = vunpack.c.l.b16 %v151
    %v635 = vunpack.c.l.b16 %v152
    %v636 = vunpack.c.l.b16 %v153
    %v637 = vunpack.c.l.b16 %v154
    %v638 = vunpack.c.l.b16 %v155
    %v639 = vunpack.c.l.b16 %v156
    %v640 = vunpack.c.l.b16 %v157
    %v641 = vunpack.c.l.b16 %v158
    %v642 = vunpack.c.l.b16 %v159
    %v643 = vunpack.c.l.b16 %v160
    %v644 = vunpack.c.l.b16 %v161
    %v645 = vunpack.c.l.b16 %v162
    %v646 = vunpack.c.l.b16 %v163
    %v647 = vunpack.c.l.b16 %v164
    %v648 = vunpack.c.l.b16 %v165
    %v649 = vunpack.c.l.b16 %v166
    %v650 = vunpack.c.l.b16 %v167
    %v651 = vunpack.c.l.b16 %v168
    %v652 = vunpack.c.l.b16 %v169
    %v653 = vunpack.c.l.b16 %v170
    %v654 = vunpack.c.l.b16 %v171
    %v655 = vunpack.c.l.b16 %v172
    %v656 = vunpack.c.l.b16 %v173
    %v657 = vunpack.c.l.b16 %v174
    %v658 = vunpack.c.l.b16 %v175
    %v659 = vunpack.c.l.b16 %v176
    %v660 = vunpack.c.l.b16 %v177
    %v661 = vunpack.c.l.b16 %v178
    %v662 = vunpack.c.l.b16 %v179
    %v663 = vunpack.c.l.b16 %v180
    %v664 = vunpack.c.l.b16 %v181
    %v665 = vunpack.c.l.b16 %v182
    %v666 = vunpack.c.l.b16 %v183
    %v667 = vunpack.c.l.b16 %v184
    %v668 = vunpack.c.l.b16 %v185
    %v669 = vunpack.c.l.b16 %v186
    %v670 = vunpack.c.l.b16 %v187
    %v671 = vunpack.c.l.b16 %v188
    %v672 = vunpack.c.l.b16 %v189
    %v673 = vpack.c.b16 %v576, %v575
    %v674 = vpack.c.b16 %v578, %v577
    %v675 = vpack.c.b16 %v580, %v579
    %v676 = vpack.c.b16 %v582, %v581
    %v677 = vpack.c.b16 %v584, %v583
    %v678 = vpack.c.b16 %v586, %v585
    %v679 = vpack.c.b16 %v588, %v587
    %v680 = vpack.c.b16 %v590, %v589
    %v681 = vpack.c.b16 %v592, %v591
    %v682 = vpack.c.b16 %v594, %v593
    %v683 = vpack.c.b16 %v596, %v595
    %v684 = vpack.c.b16 %v598, %v597
    %v685 = vpack.c.b16 %v600, %v599
    %v686 = vpack.c.b16 %v602, %v601
    %v687 = vpack.c.b16 %v604, %v603
    %v688 = vpack.c.b16 %v606, %v605
    %v689 = vpack.c.b16 %v608, %v607
    %v690 = vpack.c.b16 %v610, %v609
    %v691 = vpack.c.b16 %v612, %v611
    %v692 = vpack.c.b16 %v614, %v613
    %v693 = vpack.c.b16 %v616, %v615
    %v694 = vpack.c.b16 %v618, %v617
    %v695 = vpack.c.b16 %v620, %v619
    %v696 = vpack.c.b16 %v622, %v621
    %v697 = vpack.c.b16 %v624, %v623
    %v698 = vpack.c.b16 %v626, %v625
    %v699 = vpack.c.b16 %v628, %v627
    %v700 = vpack.c.b16 %v630, %v629
    %v701 = vpack.c.b16 %v632, %v631
    %v702 = vpack.c.b16 %v634, %v633
    %v703 = vpack.c.b16 %v636, %v635
    %v704 = vpack.c.b16 %v638, %v637
    %v705 = vpack.c.b16 %v640, %v639
    %v706 = vpack.c.b16 %v642, %v641
    %v707 = vpack.c.b16 %v644, %v643
    %v708 = vpack.c.b16 %v646, %v645
    %v709 = vpack.c.b16 %v648, %v647
    %v710 = vpack.c.b16 %v650, %v649
    %v711 = vpack.c.b16 %v652, %v651
    %v712 = vpack.c.b16 %v654, %v653
    %v713 = vpack.c.b16 %v656, %v655
    %v714 = vpack.c.b16 %v658, %v657
    %v715 = vpack.c.b16 %v660, %v659
    %v716 = vpack.c.b16 %v662, %v661
    %v717 = vpack.c.b16 %v664, %v663
    %v718 = vpack.c.b16 %v666, %v665
    %v719 = vpack.c.b16 %v668, %v667
    %v720 = vpack.c.b16 %v670, %v669
    %v721 = vpack.c.b16 %v672, %v671
    %vm771 = vcmask 130048
    %v773 = vsel %vm771, %v379, 0
    %v776 = vsel %vm771, %v386, 0
    %v779 = vsel %vm771, %v393, 0
    %v782 = vsel %vm771, %v400, 0
    %v785 = vsel %vm771, %v407, 0
    %v788 = vsel %vm771, %v414, 0
    %v791 = vsel %vm771, %v421, 0
    %v794 = vsel %vm771, %v428, 0
    %796 = vmatprep.subr.bf16.mxu0 0
    %797 = vmatpush1.bf16.msra.mxu0 %v673
    %798 = vmatprep.subr.bf16.mxu0 0
    %799 = vmatpush1.bf16.msra.mxu0 %v674
    %800 = vmatprep.subr.bf16.mxu0 0
    %801 = vmatpush1.bf16.msra.mxu0 %v675
    %802 = vmatprep.subr.bf16.mxu0 0
    %803 = vmatpush1.bf16.msra.mxu0 %v676
    %804 = vmatprep.subr.bf16.mxu0 0
    %805 = vmatpush1.bf16.msra.mxu0 %v677
    %806 = vmatprep.subr.bf16.mxu0 0
    %807 = vmatpush1.bf16.msra.mxu0 %v678
    %808 = vmatprep.subr.bf16.mxu0 0
    %809 = vmatpush1.bf16.msra.mxu0 %v679
    %810 = vmatprep.subr.bf16.mxu0 0
    %811 = vmatpush1.bf16.msra.mxu0 %v680
    %812 = vmatprep.subr.bf16.mxu0 0
    %813 = vmatpush1.bf16.msra.mxu0 %v681
    %814 = vmatprep.subr.bf16.mxu0 0
    %815 = vmatpush1.bf16.msra.mxu0 %v682
    %816 = vmatprep.subr.bf16.mxu0 0
    %817 = vmatpush1.bf16.msra.mxu0 %v683
    %818 = vmatprep.subr.bf16.mxu0 0
    %819 = vmatpush1.bf16.msra.mxu0 %v684
    %820 = vmatprep.subr.bf16.mxu0 0
    %821 = vmatpush1.bf16.msra.mxu0 %v685
    %822 = vmatprep.subr.bf16.mxu0 0
    %823 = vmatpush1.bf16.msra.mxu0 %v686
    %824 = vmatprep.subr.bf16.mxu0 0
    %825 = vmatpush1.bf16.msra.mxu0 %v687
    %826 = vmatprep.subr.bf16.mxu0 0
    %827 = vmatpush1.bf16.msra.mxu0 %v688
    %828 = vmatprep.mubr.bf16.mxu0 %v374
    %829 = vmatmul.mubr.bf16.gmra.mrb[0].mxu0 %v373
    %v830 = vpop.f32.mrb[0].mxu0
    %v831 = vadd.f32 %v195, %v830
    %v832 = vpop.f32.mrb[0].mxu0
    %v833 = vpop.f32.mrb[0].mxu0
    %v834 = vadd.f32 %v195, %v833
    %v835 = vpop.f32.mrb[0].mxu0
    %836 = vmatprep.mubr.bf16.mxu0 %v381
    %837 = vmatmul.mubr.bf16.gmra.mrb[0].mxu0 %v380
    %v838 = vpop.f32.mrb[0].mxu0
    %v839 = vadd.f32 %v195, %v838
    %v840 = vpop.f32.mrb[0].mxu0
    %v841 = vpop.f32.mrb[0].mxu0
    %v842 = vadd.f32 %v195, %v841
    %v843 = vpop.f32.mrb[0].mxu0
    %844 = vmatprep.mubr.bf16.mxu0 %v388
    %845 = vmatmul.mubr.bf16.gmra.mrb[0].mxu0 %v387
    %v846 = vpop.f32.mrb[0].mxu0
    %v847 = vadd.f32 %v195, %v846
    %v848 = vpop.f32.mrb[0].mxu0
    %v849 = vpop.f32.mrb[0].mxu0
    %v850 = vadd.f32 %v195, %v849
    %v851 = vpop.f32.mrb[0].mxu0
    %852 = vmatprep.mubr.bf16.mxu0 %v395
    %853 = vmatmul.mubr.bf16.gmra.mrb[0].mxu0 %v394
    %v854 = vpop.f32.mrb[0].mxu0
    %v855 = vadd.f32 %v195, %v854
    %v856 = vpop.f32.mrb[0].mxu0
    %v857 = vpop.f32.mrb[0].mxu0
    %v858 = vadd.f32 %v195, %v857
    %v859 = vpop.f32.mrb[0].mxu0
    %860 = vmatprep.mubr.bf16.mxu0 %v402
    %861 = vmatmul.mubr.bf16.gmra.mrb[0].mxu0 %v401
    %v862 = vpop.f32.mrb[0].mxu0
    %v863 = vadd.f32 %v195, %v862
    %v864 = vpop.f32.mrb[0].mxu0
    %v865 = vpop.f32.mrb[0].mxu0
    %v866 = vadd.f32 %v195, %v865
    %v867 = vpop.f32.mrb[0].mxu0
    %868 = vmatprep.mubr.bf16.mxu0 %v409
    %869 = vmatmul.mubr.bf16.gmra.mrb[0].mxu0 %v408
    %v870 = vpop.f32.mrb[0].mxu0
    %v871 = vadd.f32 %v195, %v870
    %v872 = vpop.f32.mrb[0].mxu0
    %v873 = vpop.f32.mrb[0].mxu0
    %v874 = vadd.f32 %v195, %v873
    %v875 = vpop.f32.mrb[0].mxu0
    %876 = vmatprep.mubr.bf16.mxu0 %v416
    %877 = vmatmul.mubr.bf16.gmra.mrb[0].mxu0 %v415
    %v878 = vpop.f32.mrb[0].mxu0
    %v879 = vadd.f32 %v195, %v878
    %v880 = vpop.f32.mrb[0].mxu0
    %v881 = vpop.f32.mrb[0].mxu0
    %v882 = vadd.f32 %v195, %v881
    %v883 = vpop.f32.mrb[0].mxu0
    %884 = vmatprep.mubr.bf16.mxu0 %v423
    %885 = vmatmul.mubr.bf16.gmra.mrb[0].mxu0 %v422
    %v886 = vpop.f32.mrb[0].mxu0
    %v887 = vadd.f32 %v195, %v886
    %v888 = vpop.f32.mrb[0].mxu0
    %v889 = vpop.f32.mrb[0].mxu0
    %v890 = vadd.f32 %v195, %v889
    %v891 = vpop.f32.mrb[0].mxu0
    %892 = vdwg.mxu0
    %893 = vmatprep.subr.bf16.mxu0 0
    %894 = vmatpush1.bf16.msra.mxu0 %v689
    %895 = vmatprep.subr.bf16.mxu0 0
    %896 = vmatpush1.bf16.msra.mxu0 %v690
    %897 = vmatprep.subr.bf16.mxu0 0
    %898 = vmatpush1.bf16.msra.mxu0 %v691
    %899 = vmatprep.subr.bf16.mxu0 0
    %900 = vmatpush1.bf16.msra.mxu0 %v692
    %901 = vmatprep.subr.bf16.mxu0 0
    %902 = vmatpush1.bf16.msra.mxu0 %v693
    %903 = vmatprep.subr.bf16.mxu0 0
    %904 = vmatpush1.bf16.msra.mxu0 %v694
    %905 = vmatprep.subr.bf16.mxu0 0
    %906 = vmatpush1.bf16.msra.mxu0 %v695
    %907 = vmatprep.subr.bf16.mxu0 0
    %908 = vmatpush1.bf16.msra.mxu0 %v696
    %909 = vmatprep.subr.bf16.mxu0 0
    %910 = vmatpush1.bf16.msra.mxu0 %v697
    %911 = vmatprep.subr.bf16.mxu0 0
    %912 = vmatpush1.bf16.msra.mxu0 %v698
    %913 = vmatprep.subr.bf16.mxu0 0
    %914 = vmatpush1.bf16.msra.mxu0 %v699
    %915 = vmatprep.subr.bf16.mxu0 0
    %916 = vmatpush1.bf16.msra.mxu0 %v700
    %917 = vmatprep.subr.bf16.mxu0 0
    %918 = vmatpush1.bf16.msra.mxu0 %v701
    %919 = vmatprep.subr.bf16.mxu0 0
    %920 = vmatpush1.bf16.msra.mxu0 %v702
    %921 = vmatprep.subr.bf16.mxu0 0
    %922 = vmatpush1.bf16.msra.mxu0 %v703
    %923 = vmatprep.subr.bf16.mxu0 0
    %924 = vmatpush1.bf16.msra.mxu0 %v704
    %925 = vmatprep.mubr.bf16.mxu0 %v376
    %926 = vmatmul.mubr.bf16.gmra.mrb[0].mxu0 %v375
    %v927 = vpop.f32.mrb[0].mxu0
    %v928 = vadd.f32 %v831, %v927
    %v929 = vpop.f32.mrb[0].mxu0
    %v930 = vpop.f32.mrb[0].mxu0
    %v931 = vadd.f32 %v834, %v930
    %v932 = vpop.f32.mrb[0].mxu0
    %933 = vmatprep.mubr.bf16.mxu0 %v383
    %934 = vmatmul.mubr.bf16.gmra.mrb[0].mxu0 %v382
    %v935 = vpop.f32.mrb[0].mxu0
    %v936 = vadd.f32 %v839, %v935
    %v937 = vpop.f32.mrb[0].mxu0
    %v938 = vpop.f32.mrb[0].mxu0
    %v939 = vadd.f32 %v842, %v938
    %v940 = vpop.f32.mrb[0].mxu0
    %941 = vmatprep.mubr.bf16.mxu0 %v390
    %942 = vmatmul.mubr.bf16.gmra.mrb[0].mxu0 %v389
    %v943 = vpop.f32.mrb[0].mxu0
    %v944 = vadd.f32 %v847, %v943
    %v945 = vpop.f32.mrb[0].mxu0
    %v946 = vpop.f32.mrb[0].mxu0
    %v947 = vadd.f32 %v850, %v946
    %v948 = vpop.f32.mrb[0].mxu0
    %949 = vmatprep.mubr.bf16.mxu0 %v397
    %950 = vmatmul.mubr.bf16.gmra.mrb[0].mxu0 %v396
    %v951 = vpop.f32.mrb[0].mxu0
    %v952 = vadd.f32 %v855, %v951
    %v953 = vpop.f32.mrb[0].mxu0
    %v954 = vpop.f32.mrb[0].mxu0
    %v955 = vadd.f32 %v858, %v954
    %v956 = vpop.f32.mrb[0].mxu0
    %957 = vmatprep.mubr.bf16.mxu0 %v404
    %958 = vmatmul.mubr.bf16.gmra.mrb[0].mxu0 %v403
    %v959 = vpop.f32.mrb[0].mxu0
    %v960 = vadd.f32 %v863, %v959
    %v961 = vpop.f32.mrb[0].mxu0
    %v962 = vpop.f32.mrb[0].mxu0
    %v963 = vadd.f32 %v866, %v962
    %v964 = vpop.f32.mrb[0].mxu0
    %965 = vmatprep.mubr.bf16.mxu0 %v411
    %966 = vmatmul.mubr.bf16.gmra.mrb[0].mxu0 %v410
    %v967 = vpop.f32.mrb[0].mxu0
    %v968 = vadd.f32 %v871, %v967
    %v969 = vpop.f32.mrb[0].mxu0
    %v970 = vpop.f32.mrb[0].mxu0
    %v971 = vadd.f32 %v874, %v970
    %v972 = vpop.f32.mrb[0].mxu0
    %973 = vmatprep.mubr.bf16.mxu0 %v418
    %974 = vmatmul.mubr.bf16.gmra.mrb[0].mxu0 %v417
    %v975 = vpop.f32.mrb[0].mxu0
    %v976 = vadd.f32 %v879, %v975
    %v977 = vpop.f32.mrb[0].mxu0
    %v978 = vpop.f32.mrb[0].mxu0
    %v979 = vadd.f32 %v882, %v978
    %v980 = vpop.f32.mrb[0].mxu0
    %981 = vmatprep.mubr.bf16.mxu0 %v425
    %982 = vmatmul.mubr.bf16.gmra.mrb[0].mxu0 %v424
    %v983 = vpop.f32.mrb[0].mxu0
    %v984 = vadd.f32 %v887, %v983
    %v985 = vpop.f32.mrb[0].mxu0
    %v986 = vpop.f32.mrb[0].mxu0
    %v987 = vadd.f32 %v890, %v986
    %v988 = vpop.f32.mrb[0].mxu0
    %989 = vdwg.mxu0
    %990 = vmatprep.subr.bf16.mxu0 0
    %991 = vmatpush1.bf16.msra.mxu0 %v705
    %992 = vmatprep.subr.bf16.mxu0 0
    %993 = vmatpush1.bf16.msra.mxu0 %v706
    %994 = vmatprep.subr.bf16.mxu0 0
    %995 = vmatpush1.bf16.msra.mxu0 %v707
    %996 = vmatprep.subr.bf16.mxu0 0
    %997 = vmatpush1.bf16.msra.mxu0 %v708
    %998 = vmatprep.subr.bf16.mxu0 0
    %999 = vmatpush1.bf16.msra.mxu0 %v709
    %1000 = vmatprep.subr.bf16.mxu0 0
    %1001 = vmatpush1.bf16.msra.mxu0 %v710
    %1002 = vmatprep.subr.bf16.mxu0 0
    %1003 = vmatpush1.bf16.msra.mxu0 %v711
    %1004 = vmatprep.subr.bf16.mxu0 0
    %1005 = vmatpush1.bf16.msra.mxu0 %v712
    %1006 = vmatprep.subr.bf16.mxu0 0
    %1007 = vmatpush1.bf16.msra.mxu0 %v713
    %1008 = vmatprep.subr.bf16.mxu0 0
    %1009 = vmatpush1.bf16.msra.mxu0 %v714
    %1010 = vmatprep.subr.bf16.mxu0 0
    %1011 = vmatpush1.bf16.msra.mxu0 %v715
    %1012 = vmatprep.subr.bf16.mxu0 0
    %1013 = vmatpush1.bf16.msra.mxu0 %v716
    %1014 = vmatprep.subr.bf16.mxu0 0
    %1015 = vmatpush1.bf16.msra.mxu0 %v717
    %1016 = vmatprep.subr.bf16.mxu0 0
    %1017 = vmatpush1.bf16.msra.mxu0 %v718
    %1018 = vmatprep.subr.bf16.mxu0 0
    %1019 = vmatpush1.bf16.msra.mxu0 %v719
    %1020 = vmatprep.subr.bf16.mxu0 0
    %1021 = vmatpush1.bf16.msra.mxu0 %v720
    %1022 = vmatprep.mubr.bf16.mxu0 %v378
    %1023 = vmatmul.mubr.bf16.gmra.mrb[0].mxu0 %v377
    %v1024 = vpop.f32.mrb[0].mxu0
    %v1025 = vadd.f32 %v928, %v1024
    %v1026 = vpop.f32.mrb[0].mxu0
    %v1027 = vpop.f32.mrb[0].mxu0
    %v1028 = vadd.f32 %v931, %v1027
    %v1029 = vpop.f32.mrb[0].mxu0
    %1030 = vmatprep.mubr.bf16.mxu0 %v385
    %1031 = vmatmul.mubr.bf16.gmra.mrb[0].mxu0 %v384
    %v1032 = vpop.f32.mrb[0].mxu0
    %v1033 = vadd.f32 %v936, %v1032
    %v1034 = vpop.f32.mrb[0].mxu0
    %v1035 = vpop.f32.mrb[0].mxu0
    %v1036 = vadd.f32 %v939, %v1035
    %v1037 = vpop.f32.mrb[0].mxu0
    %1038 = vmatprep.mubr.bf16.mxu0 %v392
    %1039 = vmatmul.mubr.bf16.gmra.mrb[0].mxu0 %v391
    %v1040 = vpop.f32.mrb[0].mxu0
    %v1041 = vadd.f32 %v944, %v1040
    %v1042 = vpop.f32.mrb[0].mxu0
    %v1043 = vpop.f32.mrb[0].mxu0
    %v1044 = vadd.f32 %v947, %v1043
    %v1045 = vpop.f32.mrb[0].mxu0
    %1046 = vmatprep.mubr.bf16.mxu0 %v399
    %1047 = vmatmul.mubr.bf16.gmra.mrb[0].mxu0 %v398
    %v1048 = vpop.f32.mrb[0].mxu0
    %v1049 = vadd.f32 %v952, %v1048
    %v1050 = vpop.f32.mrb[0].mxu0
    %v1051 = vpop.f32.mrb[0].mxu0
    %v1052 = vadd.f32 %v955, %v1051
    %v1053 = vpop.f32.mrb[0].mxu0
    %1054 = vmatprep.mubr.bf16.mxu0 %v406
    %1055 = vmatmul.mubr.bf16.gmra.mrb[0].mxu0 %v405
    %v1056 = vpop.f32.mrb[0].mxu0
    %v1057 = vadd.f32 %v960, %v1056
    %v1058 = vpop.f32.mrb[0].mxu0
    %v1059 = vpop.f32.mrb[0].mxu0
    %v1060 = vadd.f32 %v963, %v1059
    %v1061 = vpop.f32.mrb[0].mxu0
    %1062 = vmatprep.mubr.bf16.mxu0 %v413
    %1063 = vmatmul.mubr.bf16.gmra.mrb[0].mxu0 %v412
    %v1064 = vpop.f32.mrb[0].mxu0
    %v1065 = vadd.f32 %v968, %v1064
    %v1066 = vpop.f32.mrb[0].mxu0
    %v1067 = vpop.f32.mrb[0].mxu0
    %v1068 = vadd.f32 %v971, %v1067
    %v1069 = vpop.f32.mrb[0].mxu0
    %1070 = vmatprep.mubr.bf16.mxu0 %v420
    %1071 = vmatmul.mubr.bf16.gmra.mrb[0].mxu0 %v419
    %v1072 = vpop.f32.mrb[0].mxu0
    %v1073 = vadd.f32 %v976, %v1072
    %v1074 = vpop.f32.mrb[0].mxu0
    %v1075 = vpop.f32.mrb[0].mxu0
    %v1076 = vadd.f32 %v979, %v1075
    %v1077 = vpop.f32.mrb[0].mxu0
    %1078 = vmatprep.mubr.bf16.mxu0 %v427
    %1079 = vmatmul.mubr.bf16.gmra.mrb[0].mxu0 %v426
    %v1080 = vpop.f32.mrb[0].mxu0
    %v1081 = vadd.f32 %v984, %v1080
    %v1082 = vpop.f32.mrb[0].mxu0
    %v1083 = vpop.f32.mrb[0].mxu0
    %v1084 = vadd.f32 %v987, %v1083
    %v1085 = vpop.f32.mrb[0].mxu0
    %1086 = vdwg.mxu0
    %1087 = vmatprep.subr.bf16.mxu0 0
    %1088 = vmatpush1.bf16.msra.mxu0 %v721
    %1089 = vmatprep.subr.bf16.mxu0 0
    %1090 = vmatpush1.bf16.msra.mxu0 0
    %1091 = vmatprep.subr.bf16.mxu0 0
    %1092 = vmatpush1.bf16.msra.mxu0 0
    %1093 = vmatprep.subr.bf16.mxu0 0
    %1094 = vmatpush1.bf16.msra.mxu0 0
    %1095 = vmatprep.subr.bf16.mxu0 0
    %1096 = vmatpush1.bf16.msra.mxu0 0
    %1097 = vmatprep.subr.bf16.mxu0 0
    %1098 = vmatpush1.bf16.msra.mxu0 0
    %1099 = vmatprep.subr.bf16.mxu0 0
    %1100 = vmatpush1.bf16.msra.mxu0 0
    %1101 = vmatprep.subr.bf16.mxu0 0
    %1102 = vmatpush1.bf16.msra.mxu0 0
    %1103 = vmatprep.subr.bf16.mxu0 0
    %1104 = vmatpush1.bf16.msra.mxu0 0
    %1105 = vmatprep.subr.bf16.mxu0 0
    %1106 = vmatpush1.bf16.msra.mxu0 0
    %1107 = vmatprep.subr.bf16.mxu0 0
    %1108 = vmatpush1.bf16.msra.mxu0 0
    %1109 = vmatprep.subr.bf16.mxu0 0
    %1110 = vmatpush1.bf16.msra.mxu0 0
    %1111 = vmatprep.subr.bf16.mxu0 0
    %1112 = vmatpush1.bf16.msra.mxu0 0
    %1113 = vmatprep.subr.bf16.mxu0 0
    %1114 = vmatpush1.bf16.msra.mxu0 0
    %1115 = vmatprep.subr.bf16.mxu0 0
    %1116 = vmatpush1.bf16.msra.mxu0 0
    %1117 = vmatprep.subr.bf16.mxu0 0
    %1118 = vmatpush1.bf16.msra.mxu0 0
    %1119 = vmatprep.mubr.bf16.mxu0 0
    %1120 = vmatmul.mubr.bf16.gmra.mrb[0].mxu0 %v773
    %v1121 = vpop.f32.mrb[0].mxu0
    %v1122 = vadd.f32 %v1025, %v1121
    %v1123 = vpop.f32.mrb[0].mxu0
    %v1124 = vpop.f32.mrb[0].mxu0
    %v1125 = vadd.f32 %v1028, %v1124
    %v1126 = vpop.f32.mrb[0].mxu0
    %1127 = vmatprep.mubr.bf16.mxu0 0
    %1128 = vmatmul.mubr.bf16.gmra.mrb[0].mxu0 %v776
    %v1129 = vpop.f32.mrb[0].mxu0
    %v1130 = vadd.f32 %v1033, %v1129
    %v1131 = vpop.f32.mrb[0].mxu0
    %v1132 = vpop.f32.mrb[0].mxu0
    %v1133 = vadd.f32 %v1036, %v1132
    %v1134 = vpop.f32.mrb[0].mxu0
    %1135 = vmatprep.mubr.bf16.mxu0 0
    %1136 = vmatmul.mubr.bf16.gmra.mrb[0].mxu0 %v779
    %v1137 = vpop.f32.mrb[0].mxu0
    %v1138 = vadd.f32 %v1041, %v1137
    %v1139 = vpop.f32.mrb[0].mxu0
    %v1140 = vpop.f32.mrb[0].mxu0
    %v1141 = vadd.f32 %v1044, %v1140
    %v1142 = vpop.f32.mrb[0].mxu0
    %1143 = vmatprep.mubr.bf16.mxu0 0
    %1144 = vmatmul.mubr.bf16.gmra.mrb[0].mxu0 %v782
    %v1145 = vpop.f32.mrb[0].mxu0
    %v1146 = vadd.f32 %v1049, %v1145
    %v1147 = vpop.f32.mrb[0].mxu0
    %v1148 = vpop.f32.mrb[0].mxu0
    %v1149 = vadd.f32 %v1052, %v1148
    %v1150 = vpop.f32.mrb[0].mxu0
    %1151 = vmatprep.mubr.bf16.mxu0 0
    %1152 = vmatmul.mubr.bf16.gmra.mrb[0].mxu0 %v785
    %v1153 = vpop.f32.mrb[0].mxu0
    %v1154 = vadd.f32 %v1057, %v1153
    %v1155 = vpop.f32.mrb[0].mxu0
    %v1156 = vpop.f32.mrb[0].mxu0
    %v1157 = vadd.f32 %v1060, %v1156
    %v1158 = vpop.f32.mrb[0].mxu0
    %1159 = vmatprep.mubr.bf16.mxu0 0
    %1160 = vmatmul.mubr.bf16.gmra.mrb[0].mxu0 %v788
    %v1161 = vpop.f32.mrb[0].mxu0
    %v1162 = vadd.f32 %v1065, %v1161
    %v1163 = vpop.f32.mrb[0].mxu0
    %v1164 = vpop.f32.mrb[0].mxu0
    %v1165 = vadd.f32 %v1068, %v1164
    %v1166 = vpop.f32.mrb[0].mxu0
    %1167 = vmatprep.mubr.bf16.mxu0 0
    %1168 = vmatmul.mubr.bf16.gmra.mrb[0].mxu0 %v791
    %v1169 = vpop.f32.mrb[0].mxu0
    %v1170 = vadd.f32 %v1073, %v1169
    %v1171 = vpop.f32.mrb[0].mxu0
    %v1172 = vpop.f32.mrb[0].mxu0
    %v1173 = vadd.f32 %v1076, %v1172
    %v1174 = vpop.f32.mrb[0].mxu0
    %1175 = vmatprep.mubr.bf16.mxu0 0
    %1176 = vmatmul.mubr.bf16.gmra.mrb[0].mxu0 %v794
    %v1177 = vpop.f32.mrb[0].mxu0
    %v1178 = vadd.f32 %v1081, %v1177
    %v1179 = vpop.f32.mrb[0].mxu0
    %v1180 = vpop.f32.mrb[0].mxu0
    %v1181 = vadd.f32 %v1084, %v1180
    %v1182 = vpop.f32.mrb[0].mxu0
    %1183 = vdwg.mxu0
    %v1184 = vmax.f32 %v1122, 0.0
    %v1185 = vmax.f32 %v1125, 0.0
    %v1186 = vmax.f32 %v1130, 0.0
    %v1187 = vmax.f32 %v1133, 0.0
    %v1188 = vmax.f32 %v1138, 0.0
    %v1189 = vmax.f32 %v1141, 0.0
    %v1190 = vmax.f32 %v1146, 0.0
    %v1191 = vmax.f32 %v1149, 0.0
    %v1192 = vmax.f32 %v1154, 0.0
    %v1193 = vmax.f32 %v1157, 0.0
    %v1194 = vmax.f32 %v1162, 0.0
    %v1195 = vmax.f32 %v1165, 0.0
    %v1196 = vmax.f32 %v1170, 0.0
    %v1197 = vmax.f32 %v1173, 0.0
    %v1198 = vmax.f32 %v1178, 0.0
    %v1199 = vmax.f32 %v1181, 0.0
    %v1200 = vpack.c.bf16 %v1185, %v1184
    %v1201 = vpack.c.bf16 %v1187, %v1186
    %v1202 = vpack.c.bf16 %v1189, %v1188
    %v1203 = vpack.c.bf16 %v1191, %v1190
    %v1204 = vpack.c.bf16 %v1193, %v1192
    %v1205 = vpack.c.bf16 %v1195, %v1194
    %v1206 = vpack.c.bf16 %v1197, %v1196
    %v1207 = vpack.c.bf16 %v1199, %v1198
    %v1208 = vld [vmem:[%s3] sm:$0xf]
    %v1209 = vld [vmem:[%s3 + $0x4] sm:$0xf]
    %v1210 = vld [vmem:[%s3 + $0x8] sm:$0xf]
    %v1211 = vld [vmem:[%s3 + $0xc] sm:$0xf]
    %v1212 = vld [vmem:[%s3 + $0x10] sm:$0xf]
    %v1213 = vld [vmem:[%s3 + $0x14] sm:$0xf]
    %v1214 = vld [vmem:[%s3 + $0x18] sm:$0xf]
    %v1215 = vld [vmem:[%s3 + $0x1c] sm:$0xf]
    %v1216 = vld [vmem:[%s3 + $0x20] sm:$0xf]
    %v1217 = vld [vmem:[%s3 + $0x24] sm:$0xf]
    %v1218 = vld [vmem:[%s3 + $0x28] sm:$0xf]
    %v1219 = vld [vmem:[%s3 + $0x2c] sm:$0xf]
    %v1220 = vld [vmem:[%s3 + $0x30] sm:$0xf]
    %v1221 = vld [vmem:[%s3 + $0x34] sm:$0xf]
    %v1222 = vld [vmem:[%s3 + $0x38] sm:$0xf]
    %v1223 = vld [vmem:[%s3 + $0x3c] sm:$0xf]
    %v1224 = vld [vmem:[%s4] sm:$0x1]
    %v1226 = vlaneseq
    %v1227 = vshrl.u32 %v1226, 7
    %v1228 = vsub.s32 0, %v1227
    %v1229 = vrot.slane %v1224, %v1228
    %v1247 = vunpack.c.l.b16 %v1208
    %v1248 = vunpack.c.l.b16 %v1209
    %v1249 = vunpack.c.l.b16 %v1210
    %v1250 = vunpack.c.l.b16 %v1211
    %v1251 = vunpack.c.l.b16 %v1212
    %v1252 = vunpack.c.l.b16 %v1213
    %v1253 = vunpack.c.l.b16 %v1214
    %v1254 = vunpack.c.l.b16 %v1215
    %v1255 = vunpack.c.l.b16 %v1216
    %v1256 = vunpack.c.l.b16 %v1217
    %v1257 = vunpack.c.l.b16 %v1218
    %v1258 = vunpack.c.l.b16 %v1219
    %v1259 = vunpack.c.l.b16 %v1220
    %v1260 = vunpack.c.l.b16 %v1221
    %v1261 = vunpack.c.l.b16 %v1222
    %v1262 = vunpack.c.l.b16 %v1223
    %v1263 = vpack.c.b16 %v1248, %v1247
    %v1264 = vpack.c.b16 %v1250, %v1249
    %v1265 = vpack.c.b16 %v1252, %v1251
    %v1266 = vpack.c.b16 %v1254, %v1253
    %v1267 = vpack.c.b16 %v1256, %v1255
    %v1268 = vpack.c.b16 %v1258, %v1257
    %v1269 = vpack.c.b16 %v1260, %v1259
    %v1270 = vpack.c.b16 %v1262, %v1261
    %1279 = vmatprep.subr.bf16.mxu0 0
    %1280 = vmatpush1.bf16.msra.mxu0 %v1263
    %1281 = vmatprep.subr.bf16.mxu0 0
    %1282 = vmatpush1.bf16.msra.mxu0 %v1264
    %1283 = vmatprep.subr.bf16.mxu0 0
    %1284 = vmatpush1.bf16.msra.mxu0 %v1265
    %1285 = vmatprep.subr.bf16.mxu0 0
    %1286 = vmatpush1.bf16.msra.mxu0 %v1266
    %1287 = vmatprep.subr.bf16.mxu0 0
    %1288 = vmatpush1.bf16.msra.mxu0 %v1267
    %1289 = vmatprep.subr.bf16.mxu0 0
    %1290 = vmatpush1.bf16.msra.mxu0 %v1268
    %1291 = vmatprep.subr.bf16.mxu0 0
    %1292 = vmatpush1.bf16.msra.mxu0 %v1269
    %1293 = vmatprep.subr.bf16.mxu0 0
    %1294 = vmatpush1.bf16.msra.mxu0 %v1270
    %1295 = vmatprep.subr.bf16.mxu0 0
    %1296 = vmatpush1.bf16.msra.mxu0 0
    %1297 = vmatprep.subr.bf16.mxu0 0
    %1298 = vmatpush1.bf16.msra.mxu0 0
    %1299 = vmatprep.subr.bf16.mxu0 0
    %1300 = vmatpush1.bf16.msra.mxu0 0
    %1301 = vmatprep.subr.bf16.mxu0 0
    %1302 = vmatpush1.bf16.msra.mxu0 0
    %1303 = vmatprep.subr.bf16.mxu0 0
    %1304 = vmatpush1.bf16.msra.mxu0 0
    %1305 = vmatprep.subr.bf16.mxu0 0
    %1306 = vmatpush1.bf16.msra.mxu0 0
    %1307 = vmatprep.subr.bf16.mxu0 0
    %1308 = vmatpush1.bf16.msra.mxu0 0
    %1309 = vmatprep.subr.bf16.mxu0 0
    %1310 = vmatpush1.bf16.msra.mxu0 0
    %1311 = vmatprep.mubr.bf16.mxu0 0
    %1312 = vmatmul.mubr.bf16.gmra.mrb[0].mxu0 %v1200
    %v1313 = vpop.f32.mrb[0].mxu0
    %v1314 = vadd.f32 %v1229, %v1313
    %v1315 = vpop.f32.mrb[0].mxu0
    %v1316 = vpop.f32.mrb[0].mxu0
    %v1317 = vadd.f32 %v1229, %v1316
    %v1318 = vpop.f32.mrb[0].mxu0
    %1319 = vmatprep.mubr.bf16.mxu0 0
    %1320 = vmatmul.mubr.bf16.gmra.mrb[0].mxu0 %v1201
    %v1321 = vpop.f32.mrb[0].mxu0
    %v1322 = vadd.f32 %v1229, %v1321
    %v1323 = vpop.f32.mrb[0].mxu0
    %v1324 = vpop.f32.mrb[0].mxu0
    %v1325 = vadd.f32 %v1229, %v1324
    %v1326 = vpop.f32.mrb[0].mxu0
    %1327 = vmatprep.mubr.bf16.mxu0 0
    %1328 = vmatmul.mubr.bf16.gmra.mrb[0].mxu0 %v1202
    %v1329 = vpop.f32.mrb[0].mxu0
    %v1330 = vadd.f32 %v1229, %v1329
    %v1331 = vpop.f32.mrb[0].mxu0
    %v1332 = vpop.f32.mrb[0].mxu0
    %v1333 = vadd.f32 %v1229, %v1332
    %v1334 = vpop.f32.mrb[0].mxu0
    %1335 = vmatprep.mubr.bf16.mxu0 0
    %1336 = vmatmul.mubr.bf16.gmra.mrb[0].mxu0 %v1203
    %v1337 = vpop.f32.mrb[0].mxu0
    %v1338 = vadd.f32 %v1229, %v1337
    %v1339 = vpop.f32.mrb[0].mxu0
    %v1340 = vpop.f32.mrb[0].mxu0
    %v1341 = vadd.f32 %v1229, %v1340
    %v1342 = vpop.f32.mrb[0].mxu0
    %1343 = vmatprep.mubr.bf16.mxu0 0
    %1344 = vmatmul.mubr.bf16.gmra.mrb[0].mxu0 %v1204
    %v1345 = vpop.f32.mrb[0].mxu0
    %v1346 = vadd.f32 %v1229, %v1345
    %v1347 = vpop.f32.mrb[0].mxu0
    %v1348 = vpop.f32.mrb[0].mxu0
    %v1349 = vadd.f32 %v1229, %v1348
    %v1350 = vpop.f32.mrb[0].mxu0
    %1351 = vmatprep.mubr.bf16.mxu0 0
    %1352 = vmatmul.mubr.bf16.gmra.mrb[0].mxu0 %v1205
    %v1353 = vpop.f32.mrb[0].mxu0
    %v1354 = vadd.f32 %v1229, %v1353
    %v1355 = vpop.f32.mrb[0].mxu0
    %v1356 = vpop.f32.mrb[0].mxu0
    %v1357 = vadd.f32 %v1229, %v1356
    %v1358 = vpop.f32.mrb[0].mxu0
    %1359 = vmatprep.mubr.bf16.mxu0 0
    %1360 = vmatmul.mubr.bf16.gmra.mrb[0].mxu0 %v1206
    %v1361 = vpop.f32.mrb[0].mxu0
    %v1362 = vadd.f32 %v1229, %v1361
    %v1363 = vpop.f32.mrb[0].mxu0
    %v1364 = vpop.f32.mrb[0].mxu0
    %v1365 = vadd.f32 %v1229, %v1364
    %v1366 = vpop.f32.mrb[0].mxu0
    %1367 = vmatprep.mubr.bf16.mxu0 0
    %1368 = vmatmul.mubr.bf16.gmra.mrb[0].mxu0 %v1207
    %v1369 = vpop.f32.mrb[0].mxu0
    %v1370 = vadd.f32 %v1229, %v1369
    %v1371 = vpop.f32.mrb[0].mxu0
    %v1372 = vpop.f32.mrb[0].mxu0
    %v1373 = vadd.f32 %v1229, %v1372
    %v1374 = vpop.f32.mrb[0].mxu0
    %1375 = vdwg.mxu0
    %v1376 = vmax.f32 %v1314, 0.0
    %v1377 = vmax.f32 %v1317, 0.0
    %v1378 = vmax.f32 %v1322, 0.0
    %v1379 = vmax.f32 %v1325, 0.0
    %v1380 = vmax.f32 %v1330, 0.0
    %v1381 = vmax.f32 %v1333, 0.0
    %v1382 = vmax.f32 %v1338, 0.0
    %v1383 = vmax.f32 %v1341, 0.0
    %v1384 = vmax.f32 %v1346, 0.0
    %v1385 = vmax.f32 %v1349, 0.0
    %v1386 = vmax.f32 %v1354, 0.0
    %v1387 = vmax.f32 %v1357, 0.0
    %v1388 = vmax.f32 %v1362, 0.0
    %v1389 = vmax.f32 %v1365, 0.0
    %v1390 = vmax.f32 %v1370, 0.0
    %v1391 = vmax.f32 %v1373, 0.0
    %v1392 = vpack.c.bf16 %v1377, %v1376
    %v1393 = vpack.c.bf16 %v1379, %v1378
    %v1394 = vpack.c.bf16 %v1381, %v1380
    %v1395 = vpack.c.bf16 %v1383, %v1382
    %v1396 = vpack.c.bf16 %v1385, %v1384
    %v1397 = vpack.c.bf16 %v1387, %v1386
    %v1398 = vpack.c.bf16 %v1389, %v1388
    %v1399 = vpack.c.bf16 %v1391, %v1390
    %v1400 = vld [vmem:[%s5] sm:$0xf]
    %v1401 = vld [vmem:[%s5 + $0x4] sm:$0xf]
    %v1402 = vld [vmem:[%s5 + $0x8] sm:$0xf]
    %v1403 = vld [vmem:[%s5 + $0xc] sm:$0xf]
    %v1404 = vld [vmem:[%s5 + $0x10] sm:$0xf]
    %v1405 = vld [vmem:[%s5 + $0x14] sm:$0xf]
    %v1406 = vld [vmem:[%s5 + $0x18] sm:$0xf]
    %v1407 = vld [vmem:[%s5 + $0x1c] sm:$0xf]
    %v1408 = vld [vmem:[%s6] sm:$0x1]
    %v1410 = vlaneseq
    %v1411 = vshrl.u32 %v1410, 7
    %v1412 = vsub.s32 0, %v1411
    %v1413 = vrot.slane %v1408, %v1412
    %v1423 = vunpack.c.l.b16 %v1400
    %v1424 = vunpack.c.l.b16 %v1401
    %v1425 = vunpack.c.l.b16 %v1402
    %v1426 = vunpack.c.l.b16 %v1403
    %v1427 = vunpack.c.l.b16 %v1404
    %v1428 = vunpack.c.l.b16 %v1405
    %v1429 = vunpack.c.l.b16 %v1406
    %v1430 = vunpack.c.l.b16 %v1407
    %v1431 = vpack.c.b16 %v1424, %v1423
    %v1432 = vpack.c.b16 %v1426, %v1425
    %v1433 = vpack.c.b16 %v1428, %v1427
    %v1434 = vpack.c.b16 %v1430, %v1429
    %vm1439 = vcmask 523264
    %v1441 = vsel %vm1439, %v1392, 0
    %v1444 = vsel %vm1439, %v1393, 0
    %v1447 = vsel %vm1439, %v1394, 0
    %v1450 = vsel %vm1439, %v1395, 0
    %v1453 = vsel %vm1439, %v1396, 0
    %v1456 = vsel %vm1439, %v1397, 0
    %v1459 = vsel %vm1439, %v1398, 0
    %v1462 = vsel %vm1439, %v1399, 0
    %1464 = vmatprep.subr.bf16.mxu0 0
    %1465 = vmatpush1.bf16.msra.mxu0 %v1431
    %1466 = vmatprep.subr.bf16.mxu0 0
    %1467 = vmatpush1.bf16.msra.mxu0 %v1432
    %1468 = vmatprep.subr.bf16.mxu0 0
    %1469 = vmatpush1.bf16.msra.mxu0 %v1433
    %1470 = vmatprep.subr.bf16.mxu0 0
    %1471 = vmatpush1.bf16.msra.mxu0 %v1434
    %1472 = vmatprep.subr.bf16.mxu0 0
    %1473 = vmatpush1.bf16.msra.mxu0 0
    %1474 = vmatprep.subr.bf16.mxu0 0
    %1475 = vmatpush1.bf16.msra.mxu0 0
    %1476 = vmatprep.subr.bf16.mxu0 0
    %1477 = vmatpush1.bf16.msra.mxu0 0
    %1478 = vmatprep.subr.bf16.mxu0 0
    %1479 = vmatpush1.bf16.msra.mxu0 0
    %1480 = vmatprep.subr.bf16.mxu0 0
    %1481 = vmatpush1.bf16.msra.mxu0 0
    %1482 = vmatprep.subr.bf16.mxu0 0
    %1483 = vmatpush1.bf16.msra.mxu0 0
    %1484 = vmatprep.subr.bf16.mxu0 0
    %1485 = vmatpush1.bf16.msra.mxu0 0
    %1486 = vmatprep.subr.bf16.mxu0 0
    %1487 = vmatpush1.bf16.msra.mxu0 0
    %1488 = vmatprep.subr.bf16.mxu0 0
    %1489 = vmatpush1.bf16.msra.mxu0 0
    %1490 = vmatprep.subr.bf16.mxu0 0
    %1491 = vmatpush1.bf16.msra.mxu0 0
    %1492 = vmatprep.subr.bf16.mxu0 0
    %1493 = vmatpush1.bf16.msra.mxu0 0
    %1494 = vmatprep.subr.bf16.mxu0 0
    %1495 = vmatpush1.bf16.msra.mxu0 0
    %1496 = vmatprep.mubr.bf16.mxu0 0
    %1497 = vmatmul.mubr.bf16.gmra.mrb[0].mxu0 %v1441
    %v1498 = vpop.f32.mrb[0].mxu0
    %v1499 = vadd.f32 %v1413, %v1498
    %v1500 = vpop.f32.mrb[0].mxu0
    %v1501 = vpop.f32.mrb[0].mxu0
    %v1502 = vadd.f32 %v1413, %v1501
    %v1503 = vpop.f32.mrb[0].mxu0
    %1504 = vmatprep.mubr.bf16.mxu0 0
    %1505 = vmatmul.mubr.bf16.gmra.mrb[0].mxu0 %v1444
    %v1506 = vpop.f32.mrb[0].mxu0
    %v1507 = vadd.f32 %v1413, %v1506
    %v1508 = vpop.f32.mrb[0].mxu0
    %v1509 = vpop.f32.mrb[0].mxu0
    %v1510 = vadd.f32 %v1413, %v1509
    %v1511 = vpop.f32.mrb[0].mxu0
    %1512 = vmatprep.mubr.bf16.mxu0 0
    %1513 = vmatmul.mubr.bf16.gmra.mrb[0].mxu0 %v1447
    %v1514 = vpop.f32.mrb[0].mxu0
    %v1515 = vadd.f32 %v1413, %v1514
    %v1516 = vpop.f32.mrb[0].mxu0
    %v1517 = vpop.f32.mrb[0].mxu0
    %v1518 = vadd.f32 %v1413, %v1517
    %v1519 = vpop.f32.mrb[0].mxu0
    %1520 = vmatprep.mubr.bf16.mxu0 0
    %1521 = vmatmul.mubr.bf16.gmra.mrb[0].mxu0 %v1450
    %v1522 = vpop.f32.mrb[0].mxu0
    %v1523 = vadd.f32 %v1413, %v1522
    %v1524 = vpop.f32.mrb[0].mxu0
    %v1525 = vpop.f32.mrb[0].mxu0
    %v1526 = vadd.f32 %v1413, %v1525
    %v1527 = vpop.f32.mrb[0].mxu0
    %1528 = vmatprep.mubr.bf16.mxu0 0
    %1529 = vmatmul.mubr.bf16.gmra.mrb[0].mxu0 %v1453
    %v1530 = vpop.f32.mrb[0].mxu0
    %v1531 = vadd.f32 %v1413, %v1530
    %v1532 = vpop.f32.mrb[0].mxu0
    %v1533 = vpop.f32.mrb[0].mxu0
    %v1534 = vadd.f32 %v1413, %v1533
    %v1535 = vpop.f32.mrb[0].mxu0
    %1536 = vmatprep.mubr.bf16.mxu0 0
    %1537 = vmatmul.mubr.bf16.gmra.mrb[0].mxu0 %v1456
    %v1538 = vpop.f32.mrb[0].mxu0
    %v1539 = vadd.f32 %v1413, %v1538
    %v1540 = vpop.f32.mrb[0].mxu0
    %v1541 = vpop.f32.mrb[0].mxu0
    %v1542 = vadd.f32 %v1413, %v1541
    %v1543 = vpop.f32.mrb[0].mxu0
    %1544 = vmatprep.mubr.bf16.mxu0 0
    %1545 = vmatmul.mubr.bf16.gmra.mrb[0].mxu0 %v1459
    %v1546 = vpop.f32.mrb[0].mxu0
    %v1547 = vadd.f32 %v1413, %v1546
    %v1548 = vpop.f32.mrb[0].mxu0
    %v1549 = vpop.f32.mrb[0].mxu0
    %v1550 = vadd.f32 %v1413, %v1549
    %v1551 = vpop.f32.mrb[0].mxu0
    %1552 = vmatprep.mubr.bf16.mxu0 0
    %1553 = vmatmul.mubr.bf16.gmra.mrb[0].mxu0 %v1462
    %v1554 = vpop.f32.mrb[0].mxu0
    %v1555 = vadd.f32 %v1413, %v1554
    %v1556 = vpop.f32.mrb[0].mxu0
    %v1557 = vpop.f32.mrb[0].mxu0
    %v1558 = vadd.f32 %v1413, %v1557
    %v1559 = vpop.f32.mrb[0].mxu0
    %1560 = vdwg.mxu0
    %v1561 = vmax.f32 %v1499, 0.0
    %v1562 = vmax.f32 %v1502, 0.0
    %v1563 = vmax.f32 %v1507, 0.0
    %v1564 = vmax.f32 %v1510, 0.0
    %v1565 = vmax.f32 %v1515, 0.0
    %v1566 = vmax.f32 %v1518, 0.0
    %v1567 = vmax.f32 %v1523, 0.0
    %v1568 = vmax.f32 %v1526, 0.0
    %v1569 = vmax.f32 %v1531, 0.0
    %v1570 = vmax.f32 %v1534, 0.0
    %v1571 = vmax.f32 %v1539, 0.0
    %v1572 = vmax.f32 %v1542, 0.0
    %v1573 = vmax.f32 %v1547, 0.0
    %v1574 = vmax.f32 %v1550, 0.0
    %v1575 = vmax.f32 %v1555, 0.0
    %v1576 = vmax.f32 %v1558, 0.0
    %1577 = vst [vmem:[#allocation2] sm:$0xff] %v1561
    %1578 = vst [vmem:[#allocation2 + $0x8] sm:$0xff] %v1562
    %1579 = vst [vmem:[#allocation2 + $0x10] sm:$0xff] %v1563
    %1580 = vst [vmem:[#allocation2 + $0x18] sm:$0xff] %v1564
    %1581 = vst [vmem:[#allocation2 + $0x20] sm:$0xff] %v1565
    %1582 = vst [vmem:[#allocation2 + $0x28] sm:$0xff] %v1566
    %1583 = vst [vmem:[#allocation2 + $0x30] sm:$0xff] %v1567
    %1584 = vst [vmem:[#allocation2 + $0x38] sm:$0xff] %v1568
    %1585 = vst [vmem:[#allocation2 + $0x40] sm:$0xff] %v1569
    %1586 = vst [vmem:[#allocation2 + $0x48] sm:$0xff] %v1570
    %1587 = vst [vmem:[#allocation2 + $0x50] sm:$0xff] %v1571
    %1588 = vst [vmem:[#allocation2 + $0x58] sm:$0xff] %v1572
    %1589 = vst [vmem:[#allocation2 + $0x60] sm:$0xff] %v1573
    %1590 = vst [vmem:[#allocation2 + $0x68] sm:$0xff] %v1574
    %1591 = vst [vmem:[#allocation2 + $0x70] sm:$0xff] %v1575
    %1592 = vst [vmem:[#allocation2 + $0x78] sm:$0xff] %v1576
    // Predicated region
    $region30: #{tpu_custom_call.1} parent=1 // pred_check
      _
    $region31: #{tpu_custom_call.1} parent=1 // pred_check_branch
      %1594 = sbr.rel (0) target = $region33
    $region32: #{tpu_custom_call.1} parent=1 // pred_region
      %s1596 = ssub.s32 2048, 2048
      %1597 = vsyncadd [#allocation3], %s1596
      %s1598 = sshll.u32 [#allocation2], 4
      %s1599 = int_to_ptr.vmem [resolvable:$true] %s1598
      %1604 = dma.vmem_to_hbm [thread:$0]  %s1599, 2048, %s7, [#allocation3], 128, 128, 8
    $region33: #{tpu_custom_call.1} parent=1 // pred_fallthru
      _
    // Predicated region
    $region34: #{tpu_custom_call.1} parent=1 // pred_check
      _
    $region35: #{tpu_custom_call.1} parent=1 // pred_check_branch
      %1606 = sbr.rel (0) target = $region37
    $region36: #{tpu_custom_call.1} parent=1 // pred_region
      %1607 = dma.done [#allocation3], 2048
    $region37: #{tpu_custom_call.1} parent=1 // pred_fallthru
      _
    %1608 = vsyncpa [#allocation3], 1

</llo_original>
